<compile_context>
chip_gen: v6e
topology: v6e:2x2x1
jax: 0.10.0
libtpu: 0.0.40
codegen_flags: <defaults>
</compile_context>

<pallas_src>
import functools

import jax
import jax.numpy as jnp
from jax.experimental import pallas as pl
from jax.experimental.pallas import tpu as pltpu


def _dlr_kernel(x_ref, y_ref, o_ref, *, b_total):
    i = pl.program_id(0)
    nb = pl.num_programs(0)

    @pl.when(i == 0)
    def _init():
        o_ref[...] = jnp.zeros_like(o_ref)

    x = x_ref[...].astype(jnp.float32)          # (TB, C) upcast in-kernel
    y = y_ref[...]                              # (TB, 1) int32
    TB, C = x.shape

    col = jax.lax.broadcasted_iota(jnp.int32, (TB, C), 1)

    # gather x[i, y_i] via one-hot mask (exactly one match per valid row)
    x_y = jnp.sum(jnp.where(col == y, x, 0.0), axis=1, keepdims=True)

    # top-1 value and first-occurrence index
    max1 = jnp.max(x, axis=1, keepdims=True)
    idx1 = jnp.min(jnp.where(x == max1, col, C), axis=1, keepdims=True)

    # top-2: mask out the top-1 position only
    masked1 = jnp.where(col == idx1, -jnp.inf, x)
    max2 = jnp.max(masked1, axis=1, keepdims=True)
    idx2 = jnp.min(jnp.where(masked1 == max2, col, C), axis=1, keepdims=True)

    # top-3: single combined mask applied to x (no masked2 temporary)
    max3 = jnp.max(jnp.where((col == idx1) | (col == idx2), -jnp.inf, x),
                   axis=1, keepdims=True)

    # ind = 1.0 if the prediction (first-occurrence argmax) equals the label
    ind = (idx1 == y).astype(jnp.float32)

    dividend = x_y - max2 * ind - max1 * (1.0 - ind)
    divisor = max1 - max3 + 1e-12

    # mask rows that are pure block padding (B not a multiple of TB)
    row = jax.lax.broadcasted_iota(jnp.int32, (TB, 1), 0) + i * TB
    per_row = jnp.where(row < b_total, dividend / divisor, 0.0)

    o_ref[...] += jnp.sum(per_row, axis=0, keepdims=True)

    @pl.when(i == nb - 1)
    def _finish():
        o_ref[...] = -o_ref[...] * (1.0 / b_total)


def _choose_tb(B, C):
    """Row tile sized so ~7 live (TB, Cpad) f32 slabs stay under ~10 MiB.

    Fits v5e's 16 MiB scoped-VMEM default and leaves headroom on v7x (64 MiB
    physical) without raising vmem_limit_bytes.
    """
    cpad = ((max(C, 1) + 127) // 128) * 128
    budget = 10 * 1024 * 1024
    per_row = cpad * 4 * 7
    tb = max(8, min(512, (budget // per_row) // 8 * 8))
    b_pad = ((B + 7) // 8) * 8
    return min(tb, b_pad)


def dlr_loss(x, y, *, tb=None):
    """x: [B, C] float logits (f32 or bf16), y: [B] int labels -> scalar DLR loss."""
    B, C = x.shape
    y2 = y.astype(jnp.int32).reshape(B, 1)
    TB = tb if tb is not None else _choose_tb(B, C)
    nb = pl.cdiv(B, TB)

    kernel = functools.partial(_dlr_kernel, b_total=B)
    out = pl.pallas_call(
        kernel,
        out_shape=jax.ShapeDtypeStruct((1, 1), jnp.float32),
        grid_spec=pltpu.PrefetchScalarGridSpec(
            num_scalar_prefetch=0,
            grid=(nb,),
            in_specs=[
                pl.BlockSpec((TB, C), lambda i: (i, 0)),   # logits, native dtype
                pl.BlockSpec((TB, 1), lambda i: (i, 0)),   # labels
            ],
            out_specs=pl.BlockSpec((1, 1), lambda i: (0, 0)),  # resident accumulator
        ),
        compiler_params=pltpu.CompilerParams(
            dimension_semantics=("arbitrary",)),
    )(x, y2)
    return out[0, 0]


def _dlr_loss_ref(x, y):
    """Pure-JAX reference matching the PyTorch module semantics."""
    x_sorted = jnp.sort(x, axis=1)
    ind = (jnp.argmax(x, axis=1) == y).astype(x.dtype)
    dividend = (x[jnp.arange(x.shape[0]), y]
                - x_sorted[:, -2] * ind
                - x_sorted[:, -1] * (1.0 - ind))
    divisor = x_sorted[:, -1] - x_sorted[:, -3] + 1e-12
    return -jnp.mean(dividend / divisor)


if __name__ == "__main__":
    key = jax.random.PRNGKey(0)
    kx, ky = jax.random.split(key)

    # 1) Small single-block case (matches the module's natural shapes).
    B, C = 8, 10
    x = jax.random.normal(kx, (B, C), dtype=jnp.float32)
    y = jax.random.randint(ky, (B,), 0, C, dtype=jnp.int32)
    out = jax.block_until_ready(dlr_loss(x, y))
    ref = jax.block_until_ready(_dlr_loss_ref(x, y))
    assert jnp.allclose(out, ref, atol=1e-5, rtol=1e-5), (out, ref)

    # 2) Multi-block grid with B not a multiple of TB (exercises accumulation
    #    + padded-row masking).
    B2, C2 = 20, 10
    x2 = jax.random.normal(jax.random.PRNGKey(1), (B2, C2), dtype=jnp.float32)
    y2 = jax.random.randint(jax.random.PRNGKey(2), (B2,), 0, C2, dtype=jnp.int32)
    out2 = jax.block_until_ready(dlr_loss(x2, y2, tb=8))
    ref2 = jax.block_until_ready(_dlr_loss_ref(x2, y2))
    assert jnp.allclose(out2, ref2, atol=1e-5, rtol=1e-5), (out2, ref2)

    # 3) Native-bf16 DMA path (upcast happens inside the kernel).
    xb = x2.astype(jnp.bfloat16)
    out3 = jax.block_until_ready(dlr_loss(xb, y2, tb=8))
    ref3 = jax.block_until_ready(_dlr_loss_ref(xb.astype(jnp.float32), y2))
    assert jnp.allclose(out3, ref3, atol=1e-4, rtol=1e-4), (out3, ref3)

    print("KERNEL_OK")
</pallas_src>

<mosaic_0001>
module attributes {stable_mosaic.version = 11 : i64} {
  func.func @_dlr_kernel(%arg0: i32, %arg1: memref<8x10xf32, #tpu.memory_space<vmem>>, %arg2: memref<8x1xi32, #tpu.memory_space<vmem>>, %arg3: memref<1x1xf32, #tpu.memory_space<vmem>>) attributes {dimension_semantics = [#tpu.dimension_semantics<arbitrary>], iteration_bounds = array<i64: 1>, scalar_prefetch = 0 : i64, scratch_operands = 0 : i64, tpu.core_type = #tpu.core_type<tc>, window_params = [{transform_indices = @transform_0, window_bounds = array<i64: 8, 10>}, {transform_indices = @transform_1, window_bounds = array<i64: 8, 1>}, {pipeline_mode = #tpu.pipeline_mode<synchronous>, transform_indices = @transform_2, window_bounds = array<i64: 1, 1>}]} {
    %c0_i32 = arith.constant 0 : i32
    %0 = arith.cmpi eq, %arg0, %c0_i32 : i32
    %1 = arith.extui %0 : i1 to i32
    %c0_i32_0 = arith.constant 0 : i32
    %2 = arith.cmpi ne, %1, %c0_i32_0 : i32
    scf.if %2 {
      %cst_24 = arith.constant 0.000000e+00 : f32
      %70 = vector.broadcast %cst_24 : f32 to vector<1x1xf32>
      %c0_25 = arith.constant 0 : index
      %c0_26 = arith.constant 0 : index
      %71 = vector.load %arg3[%c0_25, %c0_26] : memref<1x1xf32, #tpu.memory_space<vmem>>, vector<1x1xf32>
      tpu.vector_store %arg3[%c0_25, %c0_26], %70 {strides = array<i32>} : memref<1x1xf32, #tpu.memory_space<vmem>>, vector<1x1xf32>,
    } else {
    }
    %c0 = arith.constant 0 : index
    %c0_1 = arith.constant 0 : index
    %3 = vector.load %arg1[%c0, %c0_1] : memref<8x10xf32, #tpu.memory_space<vmem>>, vector<8x10xf32>
    %c0_2 = arith.constant 0 : index
    %c0_3 = arith.constant 0 : index
    %4 = vector.load %arg2[%c0_2, %c0_3] : memref<8x1xi32, #tpu.memory_space<vmem>>, vector<8x1xi32>
    %5 = tpu.iota {dimensions = array<i32: 1>} : vector<8x10xi32>
    %6 = vector.broadcast %4 : vector<8x1xi32> to vector<8x10xi32>
    %7 = arith.cmpi eq, %5, %6 : vector<8x10xi32>
    %cst = arith.constant 0.000000e+00 : f32
    %8 = vector.broadcast %cst : f32 to vector<8x10xf32>
    %9 = arith.select %7, %3, %8 : vector<8x10xi1>, vector<8x10xf32>
    %cst_4 = arith.constant dense<0.000000e+00> : vector<8xf32>
    %10 = vector.multi_reduction <add>, %9, %cst_4 [1] : vector<8x10xf32> to vector<8xf32>
    %11 = vector.shape_cast %10 : vector<8xf32> to vector<8x1xf32>
    %cst_5 = arith.constant dense<0xFF800000> : vector<8xf32>
    %12 = vector.multi_reduction <maximumf>, %3, %cst_5 [1] : vector<8x10xf32> to vector<8xf32>
    %13 = vector.shape_cast %12 : vector<8xf32> to vector<8x1xf32>
    %14 = vector.broadcast %13 : vector<8x1xf32> to vector<8x10xf32>
    %15 = arith.cmpf oeq, %3, %14 : vector<8x10xf32>
    %c10_i32 = arith.constant 10 : i32
    %16 = vector.broadcast %c10_i32 : i32 to vector<8x10xi32>
    %17 = arith.select %15, %5, %16 : vector<8x10xi1>, vector<8x10xi32>
    %cst_6 = arith.constant dense<2147483647> : vector<8xi32>
    %18 = vector.multi_reduction <minsi>, %17, %cst_6 [1] : vector<8x10xi32> to vector<8xi32>
    %19 = vector.shape_cast %18 : vector<8xi32> to vector<8x1xi32>
    %20 = vector.broadcast %19 : vector<8x1xi32> to vector<8x10xi32>
    %21 = arith.cmpi eq, %5, %20 : vector<8x10xi32>
    %cst_7 = arith.constant 0xFF800000 : f32
    %22 = vector.broadcast %cst_7 : f32 to vector<8x10xf32>
    %23 = arith.select %21, %22, %3 : vector<8x10xi1>, vector<8x10xf32>
    %cst_8 = arith.constant dense<0xFF800000> : vector<8xf32>
    %24 = vector.multi_reduction <maximumf>, %23, %cst_8 [1] : vector<8x10xf32> to vector<8xf32>
    %25 = vector.shape_cast %24 : vector<8xf32> to vector<8x1xf32>
    %26 = vector.broadcast %25 : vector<8x1xf32> to vector<8x10xf32>
    %27 = arith.cmpf oeq, %23, %26 : vector<8x10xf32>
    %c10_i32_9 = arith.constant 10 : i32
    %28 = vector.broadcast %c10_i32_9 : i32 to vector<8x10xi32>
    %29 = arith.select %27, %5, %28 : vector<8x10xi1>, vector<8x10xi32>
    %cst_10 = arith.constant dense<2147483647> : vector<8xi32>
    %30 = vector.multi_reduction <minsi>, %29, %cst_10 [1] : vector<8x10xi32> to vector<8xi32>
    %31 = vector.shape_cast %30 : vector<8xi32> to vector<8x1xi32>
    %32 = vector.broadcast %19 : vector<8x1xi32> to vector<8x10xi32>
    %33 = arith.cmpi eq, %5, %32 : vector<8x10xi32>
    %34 = vector.broadcast %31 : vector<8x1xi32> to vector<8x10xi32>
    %35 = arith.cmpi eq, %5, %34 : vector<8x10xi32>
    %36 = arith.ori %33, %35 : vector<8x10xi1>
    %cst_11 = arith.constant 0xFF800000 : f32
    %37 = vector.broadcast %cst_11 : f32 to vector<8x10xf32>
    %38 = arith.select %36, %37, %3 : vector<8x10xi1>, vector<8x10xf32>
    %cst_12 = arith.constant dense<0xFF800000> : vector<8xf32>
    %39 = vector.multi_reduction <maximumf>, %38, %cst_12 [1] : vector<8x10xf32> to vector<8xf32>
    %40 = vector.shape_cast %39 : vector<8xf32> to vector<8x1xf32>
    %41 = arith.cmpi eq, %19, %4 : vector<8x1xi32>
    %42 = arith.extui %41 : vector<8x1xi1> to vector<8x1xi32>
    %43 = arith.sitofp %42 : vector<8x1xi32> to vector<8x1xf32>
    %44 = arith.mulf %25, %43 : vector<8x1xf32>
    %45 = arith.subf %11, %44 : vector<8x1xf32>
    %cst_13 = arith.constant 1.000000e+00 : f32
    %46 = vector.broadcast %cst_13 : f32 to vector<8x1xf32>
    %47 = arith.subf %46, %43 : vector<8x1xf32>
    %48 = arith.mulf %13, %47 : vector<8x1xf32>
    %49 = arith.subf %45, %48 : vector<8x1xf32>
    %50 = arith.subf %13, %40 : vector<8x1xf32>
    %cst_14 = arith.constant 9.99999996E-13 : f32
    %51 = vector.broadcast %cst_14 : f32 to vector<8x1xf32>
    %52 = arith.addf %50, %51 : vector<8x1xf32>
    %53 = tpu.iota {dimensions = array<i32: 0>} : vector<8x1xi32>
    %c8_i32 = arith.constant 8 : i32
    %54 = arith.muli %arg0, %c8_i32 : i32
    %55 = vector.broadcast %54 : i32 to vector<8x1xi32>
    %56 = arith.addi %53, %55 : vector<8x1xi32>
    %c8_i32_15 = arith.constant 8 : i32
    %57 = vector.broadcast %c8_i32_15 : i32 to vector<8x1xi32>
    %58 = arith.cmpi slt, %56, %57 : vector<8x1xi32>
    %59 = arith.divf %49, %52 : vector<8x1xf32>
    %cst_16 = arith.constant 0.000000e+00 : f32
    %60 = vector.broadcast %cst_16 : f32 to vector<8x1xf32>
    %61 = arith.select %58, %59, %60 : vector<8x1xi1>, vector<8x1xf32>
    %c0_17 = arith.constant 0 : index
    %c0_18 = arith.constant 0 : index
    %62 = vector.load %arg3[%c0_17, %c0_18] : memref<1x1xf32, #tpu.memory_space<vmem>>, vector<1x1xf32>
    %cst_19 = arith.constant dense<0.000000e+00> : vector<1xf32>
    %63 = vector.multi_reduction <add>, %61, %cst_19 [0] : vector<8x1xf32> to vector<1xf32>
    %64 = vector.shape_cast %63 : vector<1xf32> to vector<1x1xf32>
    %65 = arith.addf %62, %64 : vector<1x1xf32>
    %c0_20 = arith.constant 0 : index
    %c0_21 = arith.constant 0 : index
    %66 = vector.load %arg3[%c0_20, %c0_21] : memref<1x1xf32, #tpu.memory_space<vmem>>, vector<1x1xf32>
    tpu.vector_store %arg3[%c0_20, %c0_21], %65 {strides = array<i32>} : memref<1x1xf32, #tpu.memory_space<vmem>>, vector<1x1xf32>,
    %c0_i32_22 = arith.constant 0 : i32
    %67 = arith.cmpi eq, %arg0, %c0_i32_22 : i32
    %68 = arith.extui %67 : i1 to i32
    %c0_i32_23 = arith.constant 0 : i32
    %69 = arith.cmpi ne, %68, %c0_i32_23 : i32
    scf.if %69 {
      %c0_24 = arith.constant 0 : index
      %c0_25 = arith.constant 0 : index
      %70 = vector.load %arg3[%c0_24, %c0_25] : memref<1x1xf32, #tpu.memory_space<vmem>>, vector<1x1xf32>
      %cst_26 = arith.constant 0.000000e+00 : f32
      %71 = vector.broadcast %cst_26 : f32 to vector<1x1xf32>
      %72 = arith.subf %71, %70 : vector<1x1xf32>
      %cst_27 = arith.constant 1.250000e-01 : f32
      %73 = vector.broadcast %cst_27 : f32 to vector<1x1xf32>
      %74 = arith.mulf %72, %73 : vector<1x1xf32>
      %c0_28 = arith.constant 0 : index
      %c0_29 = arith.constant 0 : index
      %75 = vector.load %arg3[%c0_28, %c0_29] : memref<1x1xf32, #tpu.memory_space<vmem>>, vector<1x1xf32>
      tpu.vector_store %arg3[%c0_28, %c0_29], %74 {strides = array<i32>} : memref<1x1xf32, #tpu.memory_space<vmem>>, vector<1x1xf32>,
    } else {
    }
    return
  }
  func.func @transform_0(%arg0: i32) -> (i32, i32) {
    %c0_i32 = arith.constant 0 : i32
    %c0_i32_0 = arith.constant 0 : i32
    return %arg0, %c0_i32 : i32, i32
  }
  func.func @transform_1(%arg0: i32) -> (i32, i32) {
    %c0_i32 = arith.constant 0 : i32
    %c0_i32_0 = arith.constant 0 : i32
    return %arg0, %c0_i32 : i32, i32
  }
  func.func @transform_2(%arg0: i32) -> (i32, i32) {
    %c0_i32 = arith.constant 0 : i32
    %c0_i32_0 = arith.constant 0 : i32
    %c0_i32_1 = arith.constant 0 : i32
    return %c0_i32, %c0_i32_0 : i32, i32
  }
}

</mosaic_0001>

<llo_original>
// kernel: tpu_custom_call.1
$region0: #{tpu_custom_call.1}
  #allocation0 [shape = 'u32[]', space=smem, size = 0x4, offset = 0x4, fixed_abs, tag = 'smem constant byte address 0x4 - core index']
  #allocation1 [shape = 'u32[144,128]{1,0:T(1,128)}', space=vmem, size = 0x12000, scoped, tag = 'internal scratch']
  %s0 = inlined_call_operand.vmem [shape: f32[8,10], index: 0, kind: input, shape index: {}]
  %s1 = inlined_call_operand.vmem [shape: s32[8,1], index: 1, kind: input, shape index: {}]
  %s2 = inlined_call_operand.hbm [shape: f32[1,1], index: 2, kind: output, shape index: {}]
  %s3 = sld [smem:[#allocation0]]
  $region26: #{tpu_custom_call.1} parent=0
    _
  %s5 = ssub.s32 1, %s3
  %s6 = scalar_select 0, %s5, %s3
  $region1: #{tpu_custom_call.1} parent=0
    #allocation2 [shape = 'u8[512]{0}', space=vmem, size = 0x400, scoped, tag = 'output window, operand 0, single buffered']
    #allocation3 [shape = 's32[1]{0}', space=sflag, size = 0x4, scoped, tag = 'scoped memory for tpu_custom_call.1']
    %7 = vsyncpa [#allocation3], 0
    // Predicated region
    $region2: #{tpu_custom_call.1} parent=1 // pred_check
      _
    $region3: #{tpu_custom_call.1} parent=1 // pred_check_branch
      %9 = sbr.rel (0) target = $region5
    $region4: #{tpu_custom_call.1} parent=1 // pred_region
      _
    $region5: #{tpu_custom_call.1} parent=1 // pred_fallthru
      _
    // Predicated region
    $region6: #{tpu_custom_call.1} parent=1 // pred_check
      _
    $region7: #{tpu_custom_call.1} parent=1 // pred_check_branch
      %11 = sbr.rel (0) target = $region9
    $region8: #{tpu_custom_call.1} parent=1 // pred_region
      _
    $region9: #{tpu_custom_call.1} parent=1 // pred_fallthru
      _
    %p12 = scmp.eq.s32.totalorder 0, 0
    // Predicated region
    $region10: #{tpu_custom_call.1} parent=1 // pred_check
      %p13 = pneg %p12
    $region11: #{tpu_custom_call.1} parent=1 // pred_check_branch
      %15 = sbr.rel (%p13) target = $region13
    $region12: #{tpu_custom_call.1} parent=1 // pred_region
      %vm16 = vcmask 0
      %17 = vst.msk [vmem:[#allocation2] sm:$0x1] %vm16, 0.0
    $region13: #{tpu_custom_call.1} parent=1 // pred_fallthru
      _
    %v18 = vld [vmem:[%s0] sm:$0xff]
    %v19 = vld [vmem:[%s1] sm:$0xff]
    %v20 = vlaneseq
    %v21 = vand.u32 %v20, 127
    %22 = vset.pattern.permute.xlu0 0
    %23 = vperm.xlu0 %22, %v19
    %v24 = vpop.permute.xlu0 %23
    %vm25 = vcmp.eq.s32.totalorder %v21, %v24
    %v26 = vsel %vm25, %v18, 0.0
    %vm27 = vcmask 80896
    %v28 = vsel %vm27, %v26, 0.0
    %29 = vadd.xlane.f32.xlu0 %v28
    %v30 = vpop.xlane.xlu0 %29
    %v31 = vsel %vm27, %v18, -inf
    %32 = vmax.xlane.f32.xlu0 %v31
    %v33 = vpop.xlane.xlu0 %32
    %vm34 = vcmp.eq.f32.partialorder %v18, %v33
    %v35 = vsel %vm34, %v21, 10
    %v36 = vsel %vm27, %v35, 2147483647
    %v37 = vand.u32 %v36, 65535
    %v38 = vshra.s32 %v36, 16
    %v39 = vcvt.s32.f32 %v37
    %v40 = vcvt.s32.f32 %v38
    %41 = vmin.xlane.f32.xlu0 %v40
    %v42 = vpop.xlane.xlu0 %41
    %vm43 = vcmp.eq.f32.partialorder %v40, %v42
    %v44 = vsel %vm43, %v39, inf
    %45 = vmin.xlane.f32.xlu0 %v44
    %v46 = vpop.xlane.xlu0 %45
    %v47 = vcvt.f32.s32 %v46
    %v48 = vcvt.f32.s32 %v42
    %v49 = vshll.u32 %v48, 16
    %v50 = vadd.s32 %v49, %v47
    %vm51 = vcmp.eq.s32.totalorder %v21, %v50
    %v52 = vsel %vm51, -inf, %v18
    %v53 = vsel %vm27, %v52, -inf
    %54 = vmax.xlane.f32.xlu0 %v53
    %v55 = vpop.xlane.xlu0 %54
    %vm56 = vcmp.eq.f32.partialorder %v52, %v55
    %v57 = vsel %vm56, %v21, 10
    %v58 = vsel %vm27, %v57, 2147483647
    %v59 = vand.u32 %v58, 65535
    %v60 = vshra.s32 %v58, 16
    %v61 = vcvt.s32.f32 %v59
    %v62 = vcvt.s32.f32 %v60
    %63 = vmin.xlane.f32.xlu0 %v62
    %v64 = vpop.xlane.xlu0 %63
    %vm65 = vcmp.eq.f32.partialorder %v62, %v64
    %v66 = vsel %vm65, %v61, inf
    %67 = vmin.xlane.f32.xlu0 %v66
    %v68 = vpop.xlane.xlu0 %67
    %v69 = vcvt.f32.s32 %v68
    %v70 = vcvt.f32.s32 %v64
    %v71 = vshll.u32 %v70, 16
    %v72 = vadd.s32 %v71, %v69
    %vm73 = vcmp.eq.s32.totalorder %v21, %v72
    %vm74 = vmor %vm51, %vm73
    %v75 = vsel %vm74, -inf, %v18
    %v76 = vsel %vm27, %v75, -inf
    %77 = vmax.xlane.f32.xlu0 %v76
    %v78 = vpop.xlane.xlu0 %77
    %vm79 = vcmp.eq.s32.totalorder %v50, %v19
    %v80 = vsel %vm79, 1, 0
    %v81 = vcvt.s32.f32 %v80
    %v82 = vmul.f32 %v55, %v81
    %v83 = vsub.f32 %v30, %v82
    %v84 = vsub.f32 1.0, %v81
    %v85 = vmul.f32 %v33, %v84
    %v86 = vsub.f32 %v83, %v85
    %v87 = vsub.f32 %v33, %v78
    %v88 = vadd.f32 %v87, 1e-12
    %v89 = vlaneseq
    %v90 = vshrl.u32 %v89, 7
    %s91 = smul.u32 0, 8
    %v92 = vstv %s91
    %v93 = vadd.s32 %v90, %v92
    %vm94 = vcmp.lt.s32.totalorder %v93, 8
    %v95 = vrcp.pop %v88
    %v96 = vmul.f32 %v86, %v95
    %v97 = vsel %vm94, %v96, 0.0
    %v98 = vld [vmem:[#allocation2] sm:$0x1]
    %vm99 = vcmask 7168
    %v100 = vsel %vm99, %v97, 0.0
    %v101 = vrot.slane %v100, 4
    %v102 = vadd.f32 %v100, %v101
    %v103 = vrot.slane %v102, 2
    %v104 = vadd.f32 %v102, %v103
    %v105 = vrot.slane %v104, 1
    %v106 = vadd.f32 %v104, %v105
    %v107 = vadd.f32 %v98, %v106
    %vm108 = vcmask 0
    %109 = vst.msk [vmem:[#allocation2] sm:$0x1] %vm108, %v107
    // Predicated region
    $region14: #{tpu_custom_call.1} parent=1 // pred_check
      %p110 = pneg %p12
    $region15: #{tpu_custom_call.1} parent=1 // pred_check_branch
      %112 = sbr.rel (%p110) target = $region17
    $region16: #{tpu_custom_call.1} parent=1 // pred_region
      %v113 = vld [vmem:[#allocation2] sm:$0x1]
      %v114 = vsub.f32 0.0, %v113
      %v115 = vmul.f32 %v114, 0.125
      %116 = vst.msk [vmem:[#allocation2] sm:$0x1] %vm108, %v115
    $region17: #{tpu_custom_call.1} parent=1 // pred_fallthru
      _
    // Predicated region
    $region18: #{tpu_custom_call.1} parent=1 // pred_check
      _
    $region19: #{tpu_custom_call.1} parent=1 // pred_check_branch
      %118 = sbr.rel (0) target = $region21
    $region20: #{tpu_custom_call.1} parent=1 // pred_region
      %s120 = ssub.s32 16, 16
      %121 = vsyncadd [#allocation3], %s120
      %s123 = sshll.u32 [#allocation2], 4
      %s124 = int_to_ptr.vmem [resolvable:$true] %s123
      %126 = dma.vmem_to_hbm [thread:$0]  %s124, 16, %s2, [#allocation3]
    $region21: #{tpu_custom_call.1} parent=1 // pred_fallthru
      _
    // Predicated region
    $region22: #{tpu_custom_call.1} parent=1 // pred_check
      _
    $region23: #{tpu_custom_call.1} parent=1 // pred_check_branch
      %128 = sbr.rel (0) target = $region25
    $region24: #{tpu_custom_call.1} parent=1 // pred_region
      %129 = dma.done [#allocation3], 16
    $region25: #{tpu_custom_call.1} parent=1 // pred_fallthru
      _
    %130 = vsyncpa [#allocation3], 1

</llo_original>
